<compile_context>
chip_gen: v7x
topology: tpu7x:2x2x1
jax: 0.10.0
libtpu: 0.0.40
codegen_flags: <defaults>
</compile_context>

<pallas_src>
import math
from functools import partial

import jax
import jax.numpy as jnp
from jax.experimental import pallas as pl
from jax.experimental.pallas import tpu as pltpu


# ---------------------------------------------------------------------------
# Fused Pallas kernel (built per static layer count)
# ---------------------------------------------------------------------------
def make_fused_mlp_kernel(n_hidden):
    """Refs: x_tile, (W1, b1), ..., (Wn, bn), (Wout, bout), out_tile.

    Hidden layers: h = relu(h @ W_i + b_i)   (BN already folded into W_i, b_i)
    Output layer:  o = h @ Wout + bout
    Weights are bf16 (MXU operands); accumulation, bias add and ReLU are f32.
    Layers are unrolled at trace time; activations stay in vregs/VMEM.
    """

    def kernel(x_ref, *refs):
        o_ref = refs[-1]
        h = x_ref[...].astype(jnp.float32)
        for i in range(n_hidden):
            w = refs[2 * i][...]
            b = refs[2 * i + 1][...]
            h = jnp.dot(h.astype(w.dtype), w, preferred_element_type=jnp.float32) + b
            h = jnp.maximum(h, 0.0)
        w_out = refs[2 * n_hidden][...]
        b_out = refs[2 * n_hidden + 1][...]
        y = jnp.dot(h.astype(w_out.dtype), w_out,
                    preferred_element_type=jnp.float32) + b_out
        o_ref[...] = y.astype(o_ref.dtype)

    return kernel


# ---------------------------------------------------------------------------
# Parameter prep (done ONCE, outside the hot path):
#   fold BN into Linear in f32, transpose to (in, out), pad feature dims to a
#   multiple of 8 (sublane quantum), then cast weights to bf16. Zero padding
#   keeps the math exact (padded bias columns are 0 => ReLU keeps them 0, and
#   padded weight in-rows are 0 => they contribute nothing downstream).
# ---------------------------------------------------------------------------
def _round_up(x, m):
    return ((x + m - 1) // m) * m


def _pad2d(a, rows, cols):
    return jnp.pad(a, ((0, rows - a.shape[0]), (0, cols - a.shape[1])))


def prepare_fused_params(hidden_params, out_params, input_dim, eps=1e-5,
                         weight_dtype=jnp.bfloat16):
    """Returns ((W, b), ...) per layer. W: (in_pad, out_pad) weight_dtype,
    b: (1, out_pad) float32."""
    ops = []
    cur_pad = _round_up(input_dim, 8)
    for p in hidden_params:
        h = p["w"].shape[0]
        h_pad = _round_up(h, 8)
        scale = p["gamma"] / jnp.sqrt(p["var"] + eps)               # (h,) f32
        w_fold = (p["w"].T * scale[None, :]).astype(jnp.float32)    # (in, h)
        b_fold = (p["b"] * scale + p["beta"] - p["mean"] * scale).astype(jnp.float32)
        ops.append((_pad2d(w_fold, cur_pad, h_pad).astype(weight_dtype),
                    _pad2d(b_fold.reshape(1, h), 1, h_pad)))
        cur_pad = h_pad
    w_out, b_out = out_params
    o = w_out.shape[0]
    o_pad = _round_up(o, 8)
    ops.append((_pad2d(w_out.T.astype(jnp.float32), cur_pad, o_pad).astype(weight_dtype),
                _pad2d(b_out.reshape(1, o).astype(jnp.float32), 1, o_pad)))
    return tuple(ops)


# ---------------------------------------------------------------------------
# Forward pass: single fused pallas_call with a batch grid.
# ---------------------------------------------------------------------------
_VMEM_BUDGET = 24 * 2 ** 20  # conservative: safe on v7x (64 MiB physical VMEM)


@partial(jax.jit, static_argnums=(2,))
def fused_mlp_forward(x, fused_ops, output_dim):
    n_hidden = len(fused_ops) - 1
    B, D = x.shape
    D_pad = fused_ops[0][0].shape[0]
    O_pad = fused_ops[-1][0].shape[1]

    weight_bytes = sum(int(w.size) * w.dtype.itemsize + int(b.size) * b.dtype.itemsize
                       for w, b in fused_ops)
    if weight_bytes > _VMEM_BUDGET:
        # TODO(synk): stream weights per-layer (pltpu.emit_pipeline / K-N tiled
        # grid with a VMEM accumulator) when the model no longer fits resident.
        raise NotImplementedError("resident-weight fused MLP exceeds the VMEM budget")

    # Batch tile: as large as possible (good MXU row occupancy, pipelined x/out
    # DMA) while keeping resident weights + double-buffered tiles + the live
    # f32 activation under the VMEM budget.
    max_w = max([D_pad, O_pad] + [w.shape[1] for w, _ in fused_ops])
    per_row_bytes = 4 * (2 * D_pad + 2 * O_pad + 2 * max_w)
    TB = min(256, _round_up(B, 8))
    while TB > 8 and weight_bytes + TB * per_row_bytes > _VMEM_BUDGET:
        TB = max(8, _round_up(TB // 2, 8))
    B_pad = _round_up(B, TB)
    nb = B_pad // TB

    # Pre-kernel pad only when actually needed (no-op at the common shapes).
    x_p = x if (B_pad == B and D_pad == D) else _pad2d(x, B_pad, D_pad)

    operands = [x_p]
    in_specs = [pl.BlockSpec((TB, D_pad), lambda i: (i, 0))]
    for w, b in fused_ops:
        operands += [w, b]
        in_specs += [pl.BlockSpec(w.shape, lambda i: (0, 0)),   # resident across grid
                     pl.BlockSpec(b.shape, lambda i: (0, 0))]

    flops = 2 * B_pad * sum(int(w.shape[0]) * int(w.shape[1]) for w, _ in fused_ops)
    bytes_accessed = (int(x_p.size) * x_p.dtype.itemsize
                      + B_pad * O_pad * x.dtype.itemsize
                      + weight_bytes)

    out_padded = pl.pallas_call(
        make_fused_mlp_kernel(n_hidden),
        out_shape=jax.ShapeDtypeStruct((B_pad, O_pad), x.dtype),
        grid=(nb,),
        in_specs=in_specs,
        out_specs=pl.BlockSpec((TB, O_pad), lambda i: (i, 0)),
        compiler_params=pltpu.CompilerParams(dimension_semantics=("parallel",)),
        cost_estimate=pl.CostEstimate(flops=flops, transcendentals=0,
                                      bytes_accessed=int(bytes_accessed)),
    )(*operands)

    if B_pad == B and O_pad == output_dim:
        return out_padded
    return out_padded[:B, :output_dim]


# ---------------------------------------------------------------------------
# Parameter construction (deterministic, mimics nn.Linear / nn.BatchNorm1d init)
# ---------------------------------------------------------------------------
def init_params(key, input_dim, hidden_dims, output_dim):
    params = []
    cur = input_dim
    for h in hidden_dims:
        key, kw, kb = jax.random.split(key, 3)
        bound = 1.0 / math.sqrt(cur)
        w = jax.random.uniform(kw, (h, cur), jnp.float32, -bound, bound)  # (out, in)
        b = jax.random.uniform(kb, (h,), jnp.float32, -bound, bound)
        params.append(dict(w=w, b=b,
                           gamma=jnp.ones((h,), jnp.float32),
                           beta=jnp.zeros((h,), jnp.float32),
                           mean=jnp.zeros((h,), jnp.float32),
                           var=jnp.ones((h,), jnp.float32)))
        cur = h
    key, kw, kb = jax.random.split(key, 3)
    bound = 1.0 / math.sqrt(cur)
    w_out = jax.random.uniform(kw, (output_dim, cur), jnp.float32, -bound, bound)
    b_out = jax.random.uniform(kb, (output_dim,), jnp.float32, -bound, bound)
    return params, (w_out, b_out)


# Pure-JAX eval-mode reference (full f32, un-folded BN) for semantic validation.
def reference_forward(x, hidden_params, out_params, eps=1e-5):
    h = x
    for p in hidden_params:
        h = h @ p["w"].T + p["b"]
        h = (h - p["mean"]) / jnp.sqrt(p["var"] + eps) * p["gamma"] + p["beta"]
        h = jnp.maximum(h, 0.0)
    w_out, b_out = out_params
    return h @ w_out.T + b_out


# Reference that mirrors the kernel's quantization exactly (bf16 dot operands,
# f32 accumulation) — validates the kernel structure with a tight tolerance.
def quantized_reference_forward(x, fused_ops, output_dim):
    B, D = x.shape
    D_pad = fused_ops[0][0].shape[0]
    h = jnp.pad(x, ((0, 0), (0, D_pad - D))).astype(jnp.float32)
    for w, b in fused_ops[:-1]:
        h = jnp.dot(h.astype(w.dtype), w, preferred_element_type=jnp.float32) + b
        h = jnp.maximum(h, 0.0)
    w, b = fused_ops[-1]
    y = jnp.dot(h.astype(w.dtype), w, preferred_element_type=jnp.float32) + b
    return y[:, :output_dim].astype(x.dtype)


if __name__ == "__main__":
    key = jax.random.PRNGKey(0)
    batch, input_dim, hidden_dims, output_dim = 8, 32, [64, 32], 16

    key, kx, kp = jax.random.split(key, 3)
    x = jax.random.normal(kx, (batch, input_dim), jnp.float32)
    hidden_params, out_params = init_params(kp, input_dim, hidden_dims, output_dim)

    # One-time parameter prep (BN fold in f32 + transpose + pad + bf16 cast).
    fused_ops = prepare_fused_params(hidden_params, out_params, input_dim)

    # Small-batch run (single grid step).
    y = jax.block_until_ready(fused_mlp_forward(x, fused_ops, output_dim))
    assert y.shape == (batch, output_dim)

    y_qref = quantized_reference_forward(x, fused_ops, output_dim)
    y_ref = reference_forward(x, hidden_params, out_params)
    assert jnp.allclose(y, y_qref, atol=1e-4, rtol=1e-4), "mismatch vs bf16-matched reference"
    assert jnp.allclose(y, y_ref, atol=5e-2, rtol=5e-2), "mismatch vs f32 eval-mode reference"

    # Larger batch: exercises the multi-step batch grid / megacore-parallel path.
    x_big = jax.random.normal(jax.random.PRNGKey(1), (512, input_dim), jnp.float32)
    y_big = jax.block_until_ready(fused_mlp_forward(x_big, fused_ops, output_dim))
    y_big_ref = reference_forward(x_big, hidden_params, out_params)
    assert y_big.shape == (512, output_dim)
    assert jnp.allclose(y_big, y_big_ref, atol=5e-2, rtol=5e-2)

    print("KERNEL_OK")
</pallas_src>

<mosaic_0001>
module attributes {stable_mosaic.version = 11 : i64} {
  func.func @kernel(%arg0: i32, %arg1: memref<8x32xf32, #tpu.memory_space<vmem>>, %arg2: memref<32x64xbf16, #tpu.memory_space<vmem>>, %arg3: memref<1x64xf32, #tpu.memory_space<vmem>>, %arg4: memref<64x32xbf16, #tpu.memory_space<vmem>>, %arg5: memref<1x32xf32, #tpu.memory_space<vmem>>, %arg6: memref<32x16xbf16, #tpu.memory_space<vmem>>, %arg7: memref<1x16xf32, #tpu.memory_space<vmem>>, %arg8: memref<8x16xf32, #tpu.memory_space<vmem>>) attributes {dimension_semantics = [#tpu.dimension_semantics<parallel>], iteration_bounds = array<i64: 1>, scalar_prefetch = 0 : i64, scratch_operands = 0 : i64, tpu.core_type = #tpu.core_type<tc>, window_params = [{transform_indices = @transform_0, window_bounds = array<i64: 8, 32>}, {pipeline_mode = #tpu.pipeline_mode<synchronous>, transform_indices = @transform_1, window_bounds = array<i64: 32, 64>}, {pipeline_mode = #tpu.pipeline_mode<synchronous>, transform_indices = @transform_2, window_bounds = array<i64: 1, 64>}, {pipeline_mode = #tpu.pipeline_mode<synchronous>, transform_indices = @transform_3, window_bounds = array<i64: 64, 32>}, {pipeline_mode = #tpu.pipeline_mode<synchronous>, transform_indices = @transform_4, window_bounds = array<i64: 1, 32>}, {pipeline_mode = #tpu.pipeline_mode<synchronous>, transform_indices = @transform_5, window_bounds = array<i64: 32, 16>}, {pipeline_mode = #tpu.pipeline_mode<synchronous>, transform_indices = @transform_6, window_bounds = array<i64: 1, 16>}, {transform_indices = @transform_7, window_bounds = array<i64: 8, 16>}]} {
    %c0 = arith.constant 0 : index
    %c0_0 = arith.constant 0 : index
    %0 = vector.load %arg1[%c0, %c0_0] : memref<8x32xf32, #tpu.memory_space<vmem>>, vector<8x32xf32>
    %c0_1 = arith.constant 0 : index
    %c0_2 = arith.constant 0 : index
    %1 = vector.load %arg2[%c0_1, %c0_2] : memref<32x64xbf16, #tpu.memory_space<vmem>>, vector<32x64xbf16>
    %c0_3 = arith.constant 0 : index
    %c0_4 = arith.constant 0 : index
    %2 = vector.load %arg3[%c0_3, %c0_4] : memref<1x64xf32, #tpu.memory_space<vmem>>, vector<1x64xf32>
    %3 = arith.truncf %0 : vector<8x32xf32> to vector<8x32xbf16>
    %cst = arith.constant dense<0.000000e+00> : vector<8x64xf32>
    %4 = tpu.matmul %3, %1, %cst {dimension_numbers = #tpu.dot_dimension_numbers<[1], [0], [0], [1], [0, 0, 1, 1], [], []>} : vector<8x32xbf16>, vector<32x64xbf16>, vector<8x64xf32> -> vector<8x64xf32>
    %5 = vector.broadcast %2 : vector<1x64xf32> to vector<8x64xf32>
    %6 = arith.addf %4, %5 : vector<8x64xf32>
    %cst_5 = arith.constant 0.000000e+00 : f32
    %7 = vector.broadcast %cst_5 : f32 to vector<8x64xf32>
    %8 = arith.maximumf %6, %7 : vector<8x64xf32>
    %c0_6 = arith.constant 0 : index
    %c0_7 = arith.constant 0 : index
    %9 = vector.load %arg4[%c0_6, %c0_7] : memref<64x32xbf16, #tpu.memory_space<vmem>>, vector<64x32xbf16>
    %c0_8 = arith.constant 0 : index
    %c0_9 = arith.constant 0 : index
    %10 = vector.load %arg5[%c0_8, %c0_9] : memref<1x32xf32, #tpu.memory_space<vmem>>, vector<1x32xf32>
    %11 = arith.truncf %8 : vector<8x64xf32> to vector<8x64xbf16>
    %cst_10 = arith.constant dense<0.000000e+00> : vector<8x32xf32>
    %12 = tpu.matmul %11, %9, %cst_10 {dimension_numbers = #tpu.dot_dimension_numbers<[1], [0], [0], [1], [0, 0, 1, 1], [], []>} : vector<8x64xbf16>, vector<64x32xbf16>, vector<8x32xf32> -> vector<8x32xf32>
    %13 = vector.broadcast %10 : vector<1x32xf32> to vector<8x32xf32>
    %14 = arith.addf %12, %13 : vector<8x32xf32>
    %cst_11 = arith.constant 0.000000e+00 : f32
    %15 = vector.broadcast %cst_11 : f32 to vector<8x32xf32>
    %16 = arith.maximumf %14, %15 : vector<8x32xf32>
    %c0_12 = arith.constant 0 : index
    %c0_13 = arith.constant 0 : index
    %17 = vector.load %arg6[%c0_12, %c0_13] : memref<32x16xbf16, #tpu.memory_space<vmem>>, vector<32x16xbf16>
    %c0_14 = arith.constant 0 : index
    %c0_15 = arith.constant 0 : index
    %18 = vector.load %arg7[%c0_14, %c0_15] : memref<1x16xf32, #tpu.memory_space<vmem>>, vector<1x16xf32>
    %19 = arith.truncf %16 : vector<8x32xf32> to vector<8x32xbf16>
    %cst_16 = arith.constant dense<0.000000e+00> : vector<8x16xf32>
    %20 = tpu.matmul %19, %17, %cst_16 {dimension_numbers = #tpu.dot_dimension_numbers<[1], [0], [0], [1], [0, 0, 1, 1], [], []>} : vector<8x32xbf16>, vector<32x16xbf16>, vector<8x16xf32> -> vector<8x16xf32>
    %21 = vector.broadcast %18 : vector<1x16xf32> to vector<8x16xf32>
    %22 = arith.addf %20, %21 : vector<8x16xf32>
    %c0_17 = arith.constant 0 : index
    %c0_18 = arith.constant 0 : index
    %23 = vector.load %arg8[%c0_17, %c0_18] : memref<8x16xf32, #tpu.memory_space<vmem>>, vector<8x16xf32>
    tpu.vector_store %arg8[%c0_17, %c0_18], %22 {strides = array<i32>} : memref<8x16xf32, #tpu.memory_space<vmem>>, vector<8x16xf32>,
    return
  }
  func.func @transform_0(%arg0: i32) -> (i32, i32) {
    %c0_i32 = arith.constant 0 : i32
    %c0_i32_0 = arith.constant 0 : i32
    return %arg0, %c0_i32 : i32, i32
  }
  func.func @transform_1(%arg0: i32) -> (i32, i32) {
    %c0_i32 = arith.constant 0 : i32
    %c0_i32_0 = arith.constant 0 : i32
    %c0_i32_1 = arith.constant 0 : i32
    return %c0_i32, %c0_i32_0 : i32, i32
  }
  func.func @transform_2(%arg0: i32) -> (i32, i32) {
    %c0_i32 = arith.constant 0 : i32
    %c0_i32_0 = arith.constant 0 : i32
    %c0_i32_1 = arith.constant 0 : i32
    return %c0_i32, %c0_i32_0 : i32, i32
  }
  func.func @transform_3(%arg0: i32) -> (i32, i32) {
    %c0_i32 = arith.constant 0 : i32
    %c0_i32_0 = arith.constant 0 : i32
    %c0_i32_1 = arith.constant 0 : i32
    return %c0_i32, %c0_i32_0 : i32, i32
  }
  func.func @transform_4(%arg0: i32) -> (i32, i32) {
    %c0_i32 = arith.constant 0 : i32
    %c0_i32_0 = arith.constant 0 : i32
    %c0_i32_1 = arith.constant 0 : i32
    return %c0_i32, %c0_i32_0 : i32, i32
  }
  func.func @transform_5(%arg0: i32) -> (i32, i32) {
    %c0_i32 = arith.constant 0 : i32
    %c0_i32_0 = arith.constant 0 : i32
    %c0_i32_1 = arith.constant 0 : i32
    return %c0_i32, %c0_i32_0 : i32, i32
  }
  func.func @transform_6(%arg0: i32) -> (i32, i32) {
    %c0_i32 = arith.constant 0 : i32
    %c0_i32_0 = arith.constant 0 : i32
    %c0_i32_1 = arith.constant 0 : i32
    return %c0_i32, %c0_i32_0 : i32, i32
  }
  func.func @transform_7(%arg0: i32) -> (i32, i32) {
    %c0_i32 = arith.constant 0 : i32
    %c0_i32_0 = arith.constant 0 : i32
    return %arg0, %c0_i32 : i32, i32
  }
}

</mosaic_0001>

<llo_original>
// kernel: fused_mlp_forward.1
$region0: #{fused_mlp_forward.1}
  #allocation0 [shape = 'u32[]', space=smem, size = 0x4, offset = 0x4, fixed_abs, tag = 'smem constant byte address 0x4 - core index']
  #allocation1 [shape = 'u32[144,128]{1,0:T(1,128)}', space=vmem, size = 0x12000, scoped, tag = 'internal scratch']
  %s0 = inlined_call_operand.vmem [shape: f32[8,32], index: 0, kind: input, shape index: {}]
  %s1 = inlined_call_operand.vmem [shape: bf16[32,64], index: 1, kind: input, shape index: {}]
  %s2 = inlined_call_operand.vmem [shape: f32[1,64], index: 2, kind: input, shape index: {}]
  %s3 = inlined_call_operand.vmem [shape: bf16[64,32], index: 3, kind: input, shape index: {}]
  %s4 = inlined_call_operand.vmem [shape: f32[1,32], index: 4, kind: input, shape index: {}]
  %s5 = inlined_call_operand.vmem [shape: bf16[32,16], index: 5, kind: input, shape index: {}]
  %s6 = inlined_call_operand.vmem [shape: f32[1,16], index: 6, kind: input, shape index: {}]
  %s7 = inlined_call_operand.hbm [shape: f32[8,16], index: 7, kind: output, shape index: {}]
  %s8 = sld [smem:[#allocation0]]
  $region38: #{fused_mlp_forward.1} parent=0
    _
  %s10 = ssub.s32 1, %s8
  %s11 = scalar_select 0, %s10, %s8
  $region1: #{fused_mlp_forward.1} parent=0
    #allocation2 [shape = 'u8[4096]{0}', space=vmem, size = 0x1000, scoped, tag = 'output window, operand 0, single buffered']
    #allocation3 [shape = 's32[1]{0}', space=sflag, size = 0x4, scoped, tag = 'scoped memory for fused_mlp_forward.1']
    %12 = vsyncpa [#allocation3], 0
    // Predicated region
    $region2: #{fused_mlp_forward.1} parent=1 // pred_check
      _
    $region3: #{fused_mlp_forward.1} parent=1 // pred_check_branch
      %14 = sbr.rel (0) target = $region5
    $region4: #{fused_mlp_forward.1} parent=1 // pred_region
      _
    $region5: #{fused_mlp_forward.1} parent=1 // pred_fallthru
      _
    // Predicated region
    $region6: #{fused_mlp_forward.1} parent=1 // pred_check
      _
    $region7: #{fused_mlp_forward.1} parent=1 // pred_check_branch
      %16 = sbr.rel (0) target = $region9
    $region8: #{fused_mlp_forward.1} parent=1 // pred_region
      _
    $region9: #{fused_mlp_forward.1} parent=1 // pred_fallthru
      _
    // Predicated region
    $region10: #{fused_mlp_forward.1} parent=1 // pred_check
      _
    $region11: #{fused_mlp_forward.1} parent=1 // pred_check_branch
      %18 = sbr.rel (0) target = $region13
    $region12: #{fused_mlp_forward.1} parent=1 // pred_region
      _
    $region13: #{fused_mlp_forward.1} parent=1 // pred_fallthru
      _
    // Predicated region
    $region14: #{fused_mlp_forward.1} parent=1 // pred_check
      _
    $region15: #{fused_mlp_forward.1} parent=1 // pred_check_branch
      %20 = sbr.rel (0) target = $region17
    $region16: #{fused_mlp_forward.1} parent=1 // pred_region
      _
    $region17: #{fused_mlp_forward.1} parent=1 // pred_fallthru
      _
    // Predicated region
    $region18: #{fused_mlp_forward.1} parent=1 // pred_check
      _
    $region19: #{fused_mlp_forward.1} parent=1 // pred_check_branch
      %22 = sbr.rel (0) target = $region21
    $region20: #{fused_mlp_forward.1} parent=1 // pred_region
      _
    $region21: #{fused_mlp_forward.1} parent=1 // pred_fallthru
      _
    // Predicated region
    $region22: #{fused_mlp_forward.1} parent=1 // pred_check
      _
    $region23: #{fused_mlp_forward.1} parent=1 // pred_check_branch
      %24 = sbr.rel (0) target = $region25
    $region24: #{fused_mlp_forward.1} parent=1 // pred_region
      _
    $region25: #{fused_mlp_forward.1} parent=1 // pred_fallthru
      _
    // Predicated region
    $region26: #{fused_mlp_forward.1} parent=1 // pred_check
      _
    $region27: #{fused_mlp_forward.1} parent=1 // pred_check_branch
      %26 = sbr.rel (0) target = $region29
    $region28: #{fused_mlp_forward.1} parent=1 // pred_region
      _
    $region29: #{fused_mlp_forward.1} parent=1 // pred_fallthru
      _
    %v28 = vld [vmem:[%s0] sm:$0xff]
    %v29 = vld [vmem:[%s1] sm:$0xf]
    %v30 = vld [vmem:[%s1 + $0x4] sm:$0xf]
    %v31 = vld [vmem:[%s1 + $0x8] sm:$0xf]
    %v32 = vld [vmem:[%s1 + $0xc] sm:$0xf]
    %v33 = vld [vmem:[%s2] sm:$0x1]
    %v34 = vpack.c.bf16 %v28, %v28
    %v36 = vlaneseq
    %v37 = vshrl.u32 %v36, 7
    %v38 = vsub.s32 0, %v37
    %v39 = vrot.slane %v33, %v38
    %v45 = vunpack.c.l.b16 %v29
    %v46 = vunpack.c.l.b16 %v30
    %v47 = vunpack.c.l.b16 %v31
    %v48 = vunpack.c.l.b16 %v32
    %v49 = vpack.c.b16 %v46, %v45
    %v50 = vpack.c.b16 %v48, %v47
    %vm53 = vcmask 261120
    %v55 = vsel %vm53, %v34, 0
    %57 = vmatprep.subr.bf16.mxu0 0
    %58 = vmatpush1.bf16.msra.mxu0 %v49
    %59 = vmatprep.subr.bf16.mxu0 0
    %60 = vmatpush1.bf16.msra.mxu0 %v50
    %61 = vmatprep.subr.bf16.mxu0 0
    %62 = vmatpush1.bf16.msra.mxu0 0
    %63 = vmatprep.subr.bf16.mxu0 0
    %64 = vmatpush1.bf16.msra.mxu0 0
    %65 = vmatprep.subr.bf16.mxu0 0
    %66 = vmatpush1.bf16.msra.mxu0 0
    %67 = vmatprep.subr.bf16.mxu0 0
    %68 = vmatpush1.bf16.msra.mxu0 0
    %69 = vmatprep.subr.bf16.mxu0 0
    %70 = vmatpush1.bf16.msra.mxu0 0
    %71 = vmatprep.subr.bf16.mxu0 0
    %72 = vmatpush1.bf16.msra.mxu0 0
    %73 = vmatprep.subr.bf16.mxu0 0
    %74 = vmatpush1.bf16.msra.mxu0 0
    %75 = vmatprep.subr.bf16.mxu0 0
    %76 = vmatpush1.bf16.msra.mxu0 0
    %77 = vmatprep.subr.bf16.mxu0 0
    %78 = vmatpush1.bf16.msra.mxu0 0
    %79 = vmatprep.subr.bf16.mxu0 0
    %80 = vmatpush1.bf16.msra.mxu0 0
    %81 = vmatprep.subr.bf16.mxu0 0
    %82 = vmatpush1.bf16.msra.mxu0 0
    %83 = vmatprep.subr.bf16.mxu0 0
    %84 = vmatpush1.bf16.msra.mxu0 0
    %85 = vmatprep.subr.bf16.mxu0 0
    %86 = vmatpush1.bf16.msra.mxu0 0
    %87 = vmatprep.subr.bf16.mxu0 0
    %88 = vmatpush1.bf16.msra.mxu0 0
    %89 = vmatprep.mubr.bf16.mxu0 0
    %90 = vmatmul.mubr.bf16.gmra.mrb[0].mxu0 %v55
    %v91 = vpop.f32.mrb[0].mxu0
    %v92 = vadd.f32 %v39, %v91
    %v93 = vpop.f32.mrb[0].mxu0
    %v94 = vpop.f32.mrb[0].mxu0
    %v95 = vpop.f32.mrb[0].mxu0
    %96 = vdwg.mxu0
    %v97 = vmax.f32 %v92, 0.0
    %v98 = vld [vmem:[%s3] sm:$0xf]
    %v99 = vld [vmem:[%s3 + $0x4] sm:$0xf]
    %v100 = vld [vmem:[%s3 + $0x8] sm:$0xf]
    %v101 = vld [vmem:[%s3 + $0xc] sm:$0xf]
    %v102 = vld [vmem:[%s3 + $0x10] sm:$0xf]
    %v103 = vld [vmem:[%s3 + $0x14] sm:$0xf]
    %v104 = vld [vmem:[%s3 + $0x18] sm:$0xf]
    %v105 = vld [vmem:[%s3 + $0x1c] sm:$0xf]
    %v106 = vld [vmem:[%s4] sm:$0x1]
    %v107 = vpack.c.bf16 %v97, %v97
    %v109 = vlaneseq
    %v110 = vshrl.u32 %v109, 7
    %v111 = vsub.s32 0, %v110
    %v112 = vrot.slane %v106, %v111
    %v122 = vunpack.c.l.b16 %v98
    %v123 = vunpack.c.l.b16 %v99
    %v124 = vunpack.c.l.b16 %v100
    %v125 = vunpack.c.l.b16 %v101
    %v126 = vunpack.c.l.b16 %v102
    %v127 = vunpack.c.l.b16 %v103
    %v128 = vunpack.c.l.b16 %v104
    %v129 = vunpack.c.l.b16 %v105
    %v130 = vpack.c.b16 %v123, %v122
    %v131 = vpack.c.b16 %v125, %v124
    %v132 = vpack.c.b16 %v127, %v126
    %v133 = vpack.c.b16 %v129, %v128
    %vm138 = vcmask 523264
    %v140 = vsel %vm138, %v107, 0
    %142 = vmatprep.subr.bf16.mxu0 0
    %143 = vmatpush1.bf16.msra.mxu0 %v130
    %144 = vmatprep.subr.bf16.mxu0 0
    %145 = vmatpush1.bf16.msra.mxu0 %v131
    %146 = vmatprep.subr.bf16.mxu0 0
    %147 = vmatpush1.bf16.msra.mxu0 %v132
    %148 = vmatprep.subr.bf16.mxu0 0
    %149 = vmatpush1.bf16.msra.mxu0 %v133
    %150 = vmatprep.subr.bf16.mxu0 0
    %151 = vmatpush1.bf16.msra.mxu0 0
    %152 = vmatprep.subr.bf16.mxu0 0
    %153 = vmatpush1.bf16.msra.mxu0 0
    %154 = vmatprep.subr.bf16.mxu0 0
    %155 = vmatpush1.bf16.msra.mxu0 0
    %156 = vmatprep.subr.bf16.mxu0 0
    %157 = vmatpush1.bf16.msra.mxu0 0
    %158 = vmatprep.subr.bf16.mxu0 0
    %159 = vmatpush1.bf16.msra.mxu0 0
    %160 = vmatprep.subr.bf16.mxu0 0
    %161 = vmatpush1.bf16.msra.mxu0 0
    %162 = vmatprep.subr.bf16.mxu0 0
    %163 = vmatpush1.bf16.msra.mxu0 0
    %164 = vmatprep.subr.bf16.mxu0 0
    %165 = vmatpush1.bf16.msra.mxu0 0
    %166 = vmatprep.subr.bf16.mxu0 0
    %167 = vmatpush1.bf16.msra.mxu0 0
    %168 = vmatprep.subr.bf16.mxu0 0
    %169 = vmatpush1.bf16.msra.mxu0 0
    %170 = vmatprep.subr.bf16.mxu0 0
    %171 = vmatpush1.bf16.msra.mxu0 0
    %172 = vmatprep.subr.bf16.mxu0 0
    %173 = vmatpush1.bf16.msra.mxu0 0
    %174 = vmatprep.mubr.bf16.mxu0 0
    %175 = vmatmul.mubr.bf16.gmra.mrb[0].mxu0 %v140
    %v176 = vpop.f32.mrb[0].mxu0
    %v177 = vadd.f32 %v112, %v176
    %v178 = vpop.f32.mrb[0].mxu0
    %v179 = vpop.f32.mrb[0].mxu0
    %v180 = vpop.f32.mrb[0].mxu0
    %181 = vdwg.mxu0
    %v182 = vmax.f32 %v177, 0.0
    %v183 = vld [vmem:[%s5] sm:$0xf]
    %v184 = vld [vmem:[%s5 + $0x4] sm:$0xf]
    %v185 = vld [vmem:[%s5 + $0x8] sm:$0xf]
    %v186 = vld [vmem:[%s5 + $0xc] sm:$0xf]
    %v187 = vld [vmem:[%s6] sm:$0x1]
    %v188 = vpack.c.bf16 %v182, %v182
    %v190 = vlaneseq
    %v191 = vshrl.u32 %v190, 7
    %v192 = vsub.s32 0, %v191
    %v193 = vrot.slane %v187, %v192
    %v199 = vunpack.c.l.b16 %v183
    %v200 = vunpack.c.l.b16 %v184
    %v201 = vunpack.c.l.b16 %v185
    %v202 = vunpack.c.l.b16 %v186
    %v203 = vpack.c.b16 %v200, %v199
    %v204 = vpack.c.b16 %v202, %v201
    %v208 = vsel %vm53, %v188, 0
    %210 = vmatprep.subr.bf16.mxu0 0
    %211 = vmatpush1.bf16.msra.mxu0 %v203
    %212 = vmatprep.subr.bf16.mxu0 0
    %213 = vmatpush1.bf16.msra.mxu0 %v204
    %214 = vmatprep.subr.bf16.mxu0 0
    %215 = vmatpush1.bf16.msra.mxu0 0
    %216 = vmatprep.subr.bf16.mxu0 0
    %217 = vmatpush1.bf16.msra.mxu0 0
    %218 = vmatprep.subr.bf16.mxu0 0
    %219 = vmatpush1.bf16.msra.mxu0 0
    %220 = vmatprep.subr.bf16.mxu0 0
    %221 = vmatpush1.bf16.msra.mxu0 0
    %222 = vmatprep.subr.bf16.mxu0 0
    %223 = vmatpush1.bf16.msra.mxu0 0
    %224 = vmatprep.subr.bf16.mxu0 0
    %225 = vmatpush1.bf16.msra.mxu0 0
    %226 = vmatprep.subr.bf16.mxu0 0
    %227 = vmatpush1.bf16.msra.mxu0 0
    %228 = vmatprep.subr.bf16.mxu0 0
    %229 = vmatpush1.bf16.msra.mxu0 0
    %230 = vmatprep.subr.bf16.mxu0 0
    %231 = vmatpush1.bf16.msra.mxu0 0
    %232 = vmatprep.subr.bf16.mxu0 0
    %233 = vmatpush1.bf16.msra.mxu0 0
    %234 = vmatprep.subr.bf16.mxu0 0
    %235 = vmatpush1.bf16.msra.mxu0 0
    %236 = vmatprep.subr.bf16.mxu0 0
    %237 = vmatpush1.bf16.msra.mxu0 0
    %238 = vmatprep.subr.bf16.mxu0 0
    %239 = vmatpush1.bf16.msra.mxu0 0
    %240 = vmatprep.subr.bf16.mxu0 0
    %241 = vmatpush1.bf16.msra.mxu0 0
    %242 = vmatprep.mubr.bf16.mxu0 0
    %243 = vmatmul.mubr.bf16.gmra.mrb[0].mxu0 %v208
    %v244 = vpop.f32.mrb[0].mxu0
    %v245 = vadd.f32 %v193, %v244
    %v246 = vpop.f32.mrb[0].mxu0
    %v247 = vpop.f32.mrb[0].mxu0
    %v248 = vpop.f32.mrb[0].mxu0
    %249 = vdwg.mxu0
    %vm250 = vcmask 130048
    %251 = vst.msk [vmem:[#allocation2] sm:$0xff] %vm250, %v245
    // Predicated region
    $region30: #{fused_mlp_forward.1} parent=1 // pred_check
      _
    $region31: #{fused_mlp_forward.1} parent=1 // pred_check_branch
      %253 = sbr.rel (0) target = $region33
    $region32: #{fused_mlp_forward.1} parent=1 // pred_region
      %s255 = ssub.s32 128, 128
      %256 = vsyncadd [#allocation3], %s255
      %s258 = sshll.u32 [#allocation2], 4
      %s259 = int_to_ptr.vmem [resolvable:$true] %s258
      %261 = dma.vmem_to_hbm [thread:$0]  %s259, 128, %s7, [#allocation3]
    $region33: #{fused_mlp_forward.1} parent=1 // pred_fallthru
      _
    // Predicated region
    $region34: #{fused_mlp_forward.1} parent=1 // pred_check
      _
    $region35: #{fused_mlp_forward.1} parent=1 // pred_check_branch
      %263 = sbr.rel (0) target = $region37
    $region36: #{fused_mlp_forward.1} parent=1 // pred_region
      %264 = dma.done [#allocation3], 128
    $region37: #{fused_mlp_forward.1} parent=1 // pred_fallthru
      _
    %265 = vsyncpa [#allocation3], 1

</llo_original>
